<compile_context>
chip_gen: v7x
topology: tpu7x:2x2x1
jax: 0.10.0
libtpu: 0.0.40
codegen_flags: <defaults>
</compile_context>

<pallas_src>
import functools
import math

import numpy as np
import jax
import jax.numpy as jnp
from jax.experimental import pallas as pl
from jax.experimental.pallas import tpu as pltpu


# ----------------------------------------------------------------------------
# Bicubic interpolation weight matrix (PyTorch `interpolate(mode='bicubic')`,
# align_corners=False, cubic kernel A = -0.75, border indices clamped).
# out[j] = sum_i W[i, j] * in[i].  Cached as numpy (device-agnostic); converted
# to a device array per call.
# ----------------------------------------------------------------------------
@functools.lru_cache(maxsize=64)
def _bicubic_weight_matrix_np(in_size: int, out_size: int, A: float = -0.75) -> np.ndarray:
    def c1(x):  # |x| <= 1 branch of the cubic convolution kernel
        return ((A + 2.0) * x - (A + 3.0)) * x * x + 1.0

    def c2(x):  # 1 < |x| < 2 branch
        return ((A * x - 5.0 * A) * x + 8.0 * A) * x - 4.0 * A

    W = np.zeros((in_size, out_size), dtype=np.float32)
    scale = in_size / out_size
    for j in range(out_size):
        src = (j + 0.5) * scale - 0.5
        idx = int(math.floor(src))
        t = src - idx
        coeffs = (c2(t + 1.0), c1(t), c1(1.0 - t), c2(2.0 - t))
        for k in range(4):
            src_i = min(max(idx - 1 + k, 0), in_size - 1)
            W[src_i, j] += coeffs[k]
    return W


def _vmem_budget_bytes() -> int:
    """Generation-aware VMEM budget for the pipelined blocks."""
    cap = None
    try:
        info = pltpu.get_tpu_info()
        cap = getattr(info, "vmem_capacity_bytes", None)
    except Exception:
        cap = None
    if not cap:
        cap = 128 * 1024 * 1024  # v5e/v6e default
    # ~3/8 of physical capacity, capped at 48 MiB:
    #   v7x (64 MiB)  -> 24 MiB budget, v5e/v6e (128 MiB) -> 48 MiB budget.
    return int(min(cap * 3 // 8, 48 * 1024 * 1024))


def _tile_vmem_bytes(tile_t: int, B: int, C: int, n_samples: int, itemsize: int) -> int:
    """Double-buffered VMEM footprint of all pipelined blocks for one tile size."""
    x_blk = B * C * tile_t * itemsize
    out_blk = B * (C + 1) * tile_t * itemsize
    w_blk = n_samples * tile_t * 4
    emb_blk = B * n_samples * 4
    return 2 * (x_blk + out_blk + w_blk + emb_blk)


def _choose_time_tile(T: int, B: int, C: int, n_samples: int, itemsize: int,
                      vmem_budget: int) -> int:
    """Largest lane-dense (multiple-of-128) tile that fits the VMEM budget.

    Uses a cdiv grid (partial last block is masked by Pallas), so T need not be
    divisible by the tile.  Prefers >= 2 tiles so megacore gets work on v7x.
    """
    if T <= 128:
        return T  # full (== array dim) last-axis block; tiny, always fits
    candidates = (16384, 8192, 4096, 2048, 1024, 512, 256, 128)
    # prefer at least 2 grid steps (megacore on v7x; neutral on v5e/v6e)
    for tt in candidates:
        if tt < T and _tile_vmem_bytes(tt, B, C, n_samples, itemsize) <= vmem_budget \
                and pl.cdiv(T, tt) >= 2:
            return tt
    for tt in candidates:
        if tt <= T and _tile_vmem_bytes(tt, B, C, n_samples, itemsize) <= vmem_budget:
            return tt
    return 128


# ----------------------------------------------------------------------------
# Kernel: one grid step = one time tile for the whole batch.
#   emb_ref : (B, n_samples)        f32 VMEM (hoisted, grid-invariant)
#   w_ref   : (n_samples, tile_t)   f32 VMEM (bicubic weights, time tile)
#   x_ref   : (B, C, tile_t)        VMEM      (input tile, auto-pipelined)
#   out_ref : (B, C+1, tile_t)      VMEM      (output tile, auto-pipelined)
# ----------------------------------------------------------------------------
def _critic_front_kernel(emb_ref, w_ref, x_ref, out_ref):
    n_in_ch = x_ref.shape[1]

    # (1) pass-through of the C data channels for this time tile.
    out_ref[:, :n_in_ch, :] = x_ref[...].astype(out_ref.dtype)

    # (2) bicubic resample of the whole batch: single MXU pass per step.
    res = jnp.dot(emb_ref[...], w_ref[...],
                  preferred_element_type=jnp.float32)          # (B, tile_t)

    # (3) resampled label embedding becomes channel C of the output.
    out_ref[:, n_in_ch, :] = res.astype(out_ref.dtype)


def critic_forward(x: jax.Array, y: jax.Array, emb_table: jax.Array) -> jax.Array:
    """Forward pass of the (base) Critic: embed -> bicubic resample -> concat.

    x:         (B, C, T) float array (output dtype follows x.dtype)
    y:         (B,)      integer class labels
    emb_table: (n_classes, n_samples) embedding weights
    returns:   (B, C+1, T)
    """
    B, C, T = x.shape
    _, n_samples = emb_table.shape
    out_dtype = x.dtype
    itemsize = jnp.dtype(out_dtype).itemsize

    # Grid-invariant work hoisted to XLA: label-embedding lookup (tiny).
    emb = jnp.take(emb_table.astype(jnp.float32), y.astype(jnp.int32),
                   axis=0)                                        # (B, n_samples)

    # Bicubic resampling matrix (numpy cache -> per-call device array).
    W = jnp.asarray(_bicubic_weight_matrix_np(n_samples, T))      # (n_samples, T)

    vmem_budget = _vmem_budget_bytes()
    tile_t = _choose_time_tile(T, B, C, n_samples, itemsize, vmem_budget)
    num_t = pl.cdiv(T, tile_t)

    vmem_est = _tile_vmem_bytes(tile_t, B, C, n_samples, itemsize)
    vmem_limit = int(max(vmem_est + (4 << 20), 32 * 1024 * 1024))

    return pl.pallas_call(
        _critic_front_kernel,
        out_shape=jax.ShapeDtypeStruct((B, C + 1, T), out_dtype),
        grid=(num_t,),
        in_specs=[
            pl.BlockSpec((B, n_samples), lambda t: (0, 0)),          # hoisted embedding
            pl.BlockSpec((n_samples, tile_t), lambda t: (0, t)),     # bicubic weights
            pl.BlockSpec((B, C, tile_t), lambda t: (0, 0, t)),       # x time tile
        ],
        out_specs=pl.BlockSpec((B, C + 1, tile_t), lambda t: (0, 0, t)),
        compiler_params=pltpu.CompilerParams(
            dimension_semantics=("parallel",),
            vmem_limit_bytes=vmem_limit,
        ),
    )(emb, W, x)


if __name__ == "__main__":
    # Small shapes consistent with the module: Critic(n_samples=8, n_classes=4)
    B, C, T = 2, 4, 16          # batch, input channels, timepoints (x.shape[-1])
    n_classes = 4
    n_samples = 8

    key = jax.random.PRNGKey(0)
    kx, ky, ke = jax.random.split(key, 3)

    x = jax.random.normal(kx, (B, C, T), dtype=jnp.float32)
    y = jax.random.randint(ky, (B,), 0, n_classes, dtype=jnp.int32)
    # nn.Embedding default init ~ N(0, 1)
    emb_table = jax.random.normal(ke, (n_classes, n_samples), dtype=jnp.float32)

    out = critic_forward(x, y, emb_table)
    out = jax.block_until_ready(out)

    # pure-JAX reference of the same semantics (gather + bicubic-matmul + concat)
    W_ref = jnp.asarray(_bicubic_weight_matrix_np(n_samples, T))
    emb_rows = emb_table[y]                                   # (B, n_samples)
    emb_res = emb_rows @ W_ref                                # (B, T)
    ref = jnp.concatenate([x, emb_res[:, None, :]], axis=1)   # (B, C+1, T)

    assert out.shape == (B, C + 1, T), out.shape
    np.testing.assert_allclose(np.asarray(out), np.asarray(ref), rtol=1e-5, atol=1e-5)

    print("KERNEL_OK")
</pallas_src>

<mosaic_0001>
module attributes {stable_mosaic.version = 11 : i64} {
  func.func @_critic_front_kernel(%arg0: i32, %arg1: memref<2x8xf32, #tpu.memory_space<vmem>>, %arg2: memref<8x16xf32, #tpu.memory_space<vmem>>, %arg3: memref<2x4x16xf32, #tpu.memory_space<vmem>>, %arg4: memref<2x5x16xf32, #tpu.memory_space<vmem>>) attributes {dimension_semantics = [#tpu.dimension_semantics<parallel>], iteration_bounds = array<i64: 1>, scalar_prefetch = 0 : i64, scratch_operands = 0 : i64, tpu.core_type = #tpu.core_type<tc>, window_params = [{pipeline_mode = #tpu.pipeline_mode<synchronous>, transform_indices = @transform_0, window_bounds = array<i64: 2, 8>}, {transform_indices = @transform_1, window_bounds = array<i64: 8, 16>}, {transform_indices = @transform_2, window_bounds = array<i64: 2, 4, 16>}, {transform_indices = @transform_3, window_bounds = array<i64: 2, 5, 16>}]} {
    %c0 = arith.constant 0 : index
    %c0_0 = arith.constant 0 : index
    %c0_1 = arith.constant 0 : index
    %0 = vector.load %arg3[%c0, %c0_0, %c0_1] : memref<2x4x16xf32, #tpu.memory_space<vmem>>, vector<2x4x16xf32>
    %c0_2 = arith.constant 0 : index
    %c0_3 = arith.constant 0 : index
    %c0_4 = arith.constant 0 : index
    %1 = vector.load %arg4[%c0_2, %c0_3, %c0_4] : memref<2x5x16xf32, #tpu.memory_space<vmem>>, vector<2x4x16xf32>
    tpu.vector_store %arg4[%c0_2, %c0_3, %c0_4], %0 {strides = array<i32>} : memref<2x5x16xf32, #tpu.memory_space<vmem>>, vector<2x4x16xf32>,
    %c0_5 = arith.constant 0 : index
    %c0_6 = arith.constant 0 : index
    %2 = vector.load %arg1[%c0_5, %c0_6] : memref<2x8xf32, #tpu.memory_space<vmem>>, vector<2x8xf32>
    %c0_7 = arith.constant 0 : index
    %c0_8 = arith.constant 0 : index
    %3 = vector.load %arg2[%c0_7, %c0_8] : memref<8x16xf32, #tpu.memory_space<vmem>>, vector<8x16xf32>
    %cst = arith.constant dense<0.000000e+00> : vector<2x16xf32>
    %4 = tpu.matmul %2, %3, %cst {dimension_numbers = #tpu.dot_dimension_numbers<[1], [0], [0], [1], [0, 0, 1, 1], [], []>} : vector<2x8xf32>, vector<8x16xf32>, vector<2x16xf32> -> vector<2x16xf32>
    %c0_9 = arith.constant 0 : index
    %c4 = arith.constant 4 : index
    %c0_10 = arith.constant 0 : index
    %5 = vector.load %arg4[%c0_9, %c4, %c0_10] : memref<2x5x16xf32, #tpu.memory_space<vmem>>, vector<2x1x16xf32>
    %6 = vector.shape_cast %5 : vector<2x1x16xf32> to vector<2x16xf32>
    %7 = vector.shape_cast %4 : vector<2x16xf32> to vector<2x1x16xf32>
    tpu.vector_store %arg4[%c0_9, %c4, %c0_10], %7 {strides = array<i32>} : memref<2x5x16xf32, #tpu.memory_space<vmem>>, vector<2x1x16xf32>,
    return
  }
  func.func @transform_0(%arg0: i32) -> (i32, i32) {
    %c0_i32 = arith.constant 0 : i32
    %c0_i32_0 = arith.constant 0 : i32
    %c0_i32_1 = arith.constant 0 : i32
    return %c0_i32, %c0_i32_0 : i32, i32
  }
  func.func @transform_1(%arg0: i32) -> (i32, i32) {
    %c0_i32 = arith.constant 0 : i32
    %c0_i32_0 = arith.constant 0 : i32
    return %c0_i32, %arg0 : i32, i32
  }
  func.func @transform_2(%arg0: i32) -> (i32, i32, i32) {
    %c0_i32 = arith.constant 0 : i32
    %c0_i32_0 = arith.constant 0 : i32
    %c0_i32_1 = arith.constant 0 : i32
    return %c0_i32, %c0_i32_0, %arg0 : i32, i32, i32
  }
  func.func @transform_3(%arg0: i32) -> (i32, i32, i32) {
    %c0_i32 = arith.constant 0 : i32
    %c0_i32_0 = arith.constant 0 : i32
    %c0_i32_1 = arith.constant 0 : i32
    return %c0_i32, %c0_i32_0, %arg0 : i32, i32, i32
  }
}

</mosaic_0001>

<llo_original>
// kernel: tpu_custom_call.1
$region0: #{tpu_custom_call.1}
  #allocation0 [shape = 'u32[]', space=smem, size = 0x4, offset = 0x4, fixed_abs, tag = 'smem constant byte address 0x4 - core index']
  #allocation1 [shape = 'u32[144,128]{1,0:T(1,128)}', space=vmem, size = 0x12000, scoped, tag = 'internal scratch']
  %s0 = inlined_call_operand.hbm [shape: f32[2,8], index: 0, kind: input, shape index: {}]
  %s1 = inlined_call_operand.hbm [shape: f32[8,16], index: 1, kind: input, shape index: {}]
  %s2 = inlined_call_operand.hbm [shape: f32[2,4,16], index: 2, kind: input, shape index: {}]
  %s3 = inlined_call_operand.vmem [shape: f32[2,5,16], index: 3, kind: output, shape index: {}]
  %s4 = sld [smem:[#allocation0]]
  $region34: #{tpu_custom_call.1} parent=0
    _
  %s6 = ssub.s32 1, %s4
  %s7 = scalar_select 0, %s6, %s4
  $region1: #{tpu_custom_call.1} parent=0
    #allocation2 [shape = 'u8[1024]{0}', space=vmem, size = 0x400, scoped, tag = 'input window, operand 0, single buffered']
    #allocation3 [shape = 's32[1]{0}', space=sflag, size = 0x4, scoped, tag = 'scoped memory for tpu_custom_call.1']
    #allocation4 [shape = 'u8[4096]{0}', space=vmem, size = 0x1000, scoped, tag = 'input window, operand 1, single buffered']
    #allocation5 [shape = 's32[1]{0}', space=sflag, size = 0x4, scoped, tag = 'scoped memory for tpu_custom_call.1']
    #allocation6 [shape = 'u8[4096]{0}', space=vmem, size = 0x1000, scoped, tag = 'input window, operand 2, single buffered']
    %8 = vsyncpa [#allocation3], 0
    %9 = vsyncpa [#allocation5], 0
    // Predicated region
    $region2: #{tpu_custom_call.1} parent=1 // pred_check
      _
    $region3: #{tpu_custom_call.1} parent=1 // pred_check_branch
      %11 = sbr.rel (0) target = $region5
    $region4: #{tpu_custom_call.1} parent=1 // pred_region
      %s13 = ssub.s32 32, 32
      %14 = vsyncadd [#allocation3], %s13
      %s16 = sshll.u32 [#allocation2], 4
      %s17 = int_to_ptr.vmem [resolvable:$true] %s16
      %19 = dma.hbm_to_vmem [thread:$0]  %s0, 32, %s17, [#allocation3]
    $region5: #{tpu_custom_call.1} parent=1 // pred_fallthru
      _
    // Predicated region
    $region6: #{tpu_custom_call.1} parent=1 // pred_check
      _
    $region7: #{tpu_custom_call.1} parent=1 // pred_check_branch
      %21 = sbr.rel (0) target = $region9
    $region8: #{tpu_custom_call.1} parent=1 // pred_region
      %s23 = ssub.s32 128, 128
      %24 = vsyncadd [#allocation5], %s23
      %s26 = sshll.u32 [#allocation4], 4
      %s27 = int_to_ptr.vmem [resolvable:$true] %s26
      %29 = dma.hbm_to_vmem [thread:$0]  %s1, 128, %s27, [#allocation5]
    $region9: #{tpu_custom_call.1} parent=1 // pred_fallthru
      _
    // Predicated region
    $region10: #{tpu_custom_call.1} parent=1 // pred_check
      _
    $region11: #{tpu_custom_call.1} parent=1 // pred_check_branch
      %31 = sbr.rel (0) target = $region13
    $region12: #{tpu_custom_call.1} parent=1 // pred_region
      %s33 = ssub.s32 128, 128
      %34 = vsyncadd [#allocation5], %s33
      %s35 = sshll.u32 [#allocation6], 4
      %s36 = int_to_ptr.vmem [resolvable:$true] %s35
      %41 = dma.hbm_to_vmem [thread:$0]  %s2, 128, %s36, [#allocation5], 64, 64, 4
    $region13: #{tpu_custom_call.1} parent=1 // pred_fallthru
      _
    // Predicated region
    $region14: #{tpu_custom_call.1} parent=1 // pred_check
      _
    $region15: #{tpu_custom_call.1} parent=1 // pred_check_branch
      %43 = sbr.rel (0) target = $region17
    $region16: #{tpu_custom_call.1} parent=1 // pred_region
      %44 = dma.done [#allocation3], 32
    $region17: #{tpu_custom_call.1} parent=1 // pred_fallthru
      _
    // Predicated region
    $region18: #{tpu_custom_call.1} parent=1 // pred_check
      _
    $region19: #{tpu_custom_call.1} parent=1 // pred_check_branch
      %46 = sbr.rel (0) target = $region21
    $region20: #{tpu_custom_call.1} parent=1 // pred_region
      %47 = dma.done [#allocation5], 128
    $region21: #{tpu_custom_call.1} parent=1 // pred_fallthru
      _
    // Predicated region
    $region22: #{tpu_custom_call.1} parent=1 // pred_check
      _
    $region23: #{tpu_custom_call.1} parent=1 // pred_check_branch
      %49 = sbr.rel (0) target = $region25
    $region24: #{tpu_custom_call.1} parent=1 // pred_region
      %50 = dma.done [#allocation5], 128
    $region25: #{tpu_custom_call.1} parent=1 // pred_fallthru
      _
    %v51 = vld [vmem:[#allocation6] sm:$0xf]
    %v52 = vld [vmem:[#allocation6 + $0x4] sm:$0xf]
    %vm53 = vcmask 125952
    %54 = vst.msk [vmem:[%s3] sm:$0xf] %vm53, %v51
    %55 = vst.msk [vmem:[%s3 + $0x8] sm:$0xf] %vm53, %v52
    %v56 = vld [vmem:[#allocation2] sm:$0x3]
    %v57 = vld [vmem:[#allocation4] sm:$0xff]
    %vm58 = vcmask 64512
    %v60 = vsel %vm58, %v56, 0
    %62 = vmatprep.subr.mxu0 0.0
    %63 = vmatpush1.msra.mxu0 %v57
    %64 = vmatprep.subr.mxu0 0.0
    %65 = vmatpush1.msra.mxu0 0.0
    %66 = vmatprep.subr.mxu0 0.0
    %67 = vmatpush1.msra.mxu0 0.0
    %68 = vmatprep.subr.mxu0 0.0
    %69 = vmatpush1.msra.mxu0 0.0
    %70 = vmatprep.subr.mxu0 0.0
    %71 = vmatpush1.msra.mxu0 0.0
    %72 = vmatprep.subr.mxu0 0.0
    %73 = vmatpush1.msra.mxu0 0.0
    %74 = vmatprep.subr.mxu0 0.0
    %75 = vmatpush1.msra.mxu0 0.0
    %76 = vmatprep.subr.mxu0 0.0
    %77 = vmatpush1.msra.mxu0 0.0
    %78 = vmatprep.subr.mxu0 0.0
    %79 = vmatpush1.msra.mxu0 0.0
    %80 = vmatprep.subr.mxu0 0.0
    %81 = vmatpush1.msra.mxu0 0.0
    %82 = vmatprep.subr.mxu0 0.0
    %83 = vmatpush1.msra.mxu0 0.0
    %84 = vmatprep.subr.mxu0 0.0
    %85 = vmatpush1.msra.mxu0 0.0
    %86 = vmatprep.subr.mxu0 0.0
    %87 = vmatpush1.msra.mxu0 0.0
    %88 = vmatprep.subr.mxu0 0.0
    %89 = vmatpush1.msra.mxu0 0.0
    %90 = vmatprep.subr.mxu0 0.0
    %91 = vmatpush1.msra.mxu0 0.0
    %92 = vmatprep.subr.mxu0 0.0
    %93 = vmatpush1.msra.mxu0 0.0
    %94 = vmatprep.subr.mxu0 0.0
    %95 = vmatpush1.msra.mxu0 0.0
    %96 = vmatprep.subr.mxu0 0.0
    %97 = vmatpush1.msra.mxu0 0.0
    %98 = vmatprep.subr.mxu0 0.0
    %99 = vmatpush1.msra.mxu0 0.0
    %100 = vmatprep.subr.mxu0 0.0
    %101 = vmatpush1.msra.mxu0 0.0
    %102 = vmatprep.subr.mxu0 0.0
    %103 = vmatpush1.msra.mxu0 0.0
    %104 = vmatprep.subr.mxu0 0.0
    %105 = vmatpush1.msra.mxu0 0.0
    %106 = vmatprep.subr.mxu0 0.0
    %107 = vmatpush1.msra.mxu0 0.0
    %108 = vmatprep.subr.mxu0 0.0
    %109 = vmatpush1.msra.mxu0 0.0
    %110 = vmatprep.subr.mxu0 0.0
    %111 = vmatpush1.msra.mxu0 0.0
    %112 = vmatprep.subr.mxu0 0.0
    %113 = vmatpush1.msra.mxu0 0.0
    %114 = vmatprep.subr.mxu0 0.0
    %115 = vmatpush1.msra.mxu0 0.0
    %116 = vmatprep.subr.mxu0 0.0
    %117 = vmatpush1.msra.mxu0 0.0
    %118 = vmatprep.subr.mxu0 0.0
    %119 = vmatpush1.msra.mxu0 0.0
    %120 = vmatprep.subr.mxu0 0.0
    %121 = vmatpush1.msra.mxu0 0.0
    %122 = vmatprep.subr.mxu0 0.0
    %123 = vmatpush1.msra.mxu0 0.0
    %124 = vmatprep.subr.mxu0 0.0
    %125 = vmatpush1.msra.mxu0 0.0
    %126 = vmatprep.mubr.f32.mxu0 0.0
    %127 = vmatmul.mubr.f32.gmra.mrb[0].mxu0 %v60
    %v128 = vpop.f32.mrb[0].mxu0
    %v129 = vadd.f32 0.0, %v128
    %v130 = vpop.f32.mrb[0].mxu0
    %131 = vdwg.mxu0
    %v134 = vunpack.c.l.s4 1966171168
    %v135 = vunpack.c.0.s8 %v134
    %v136 = vlaneseq
    %v137 = vshrl.u32 %v136, 7
    %v138 = vsub.s32 %v135, %v137
    %v139 = vrot.slane %v129, %v138
    %v140 = vcombine.high %v139, %v139
    %v142 = vunpack.c.l.s4 1966171168
    %v143 = vunpack.c.0.s8 %v142
    %v144 = vlaneseq
    %v145 = vshrl.u32 %v144, 7
    %v146 = vsub.s32 %v143, %v145
    %v147 = vrot.slane %v139, %v146
    %v149 = vunpack.c.l.s4 1966171168
    %v150 = vunpack.c.0.s8 %v149
    %v151 = vlaneseq
    %v152 = vshrl.u32 %v151, 7
    %v153 = vsub.s32 %v150, %v152
    %v154 = vrot.slane %v140, %v153
    %vm157 = vcmask 122880
    %158 = vst.msk [vmem:[%s3 + $0x4] sm:$0x1] %vm157, %v147
    %159 = vst.msk [vmem:[%s3 + $0xc] sm:$0x1] %vm157, %v154
    // Predicated region
    $region26: #{tpu_custom_call.1} parent=1 // pred_check
      _
    $region27: #{tpu_custom_call.1} parent=1 // pred_check_branch
      %161 = sbr.rel (0) target = $region29
    $region28: #{tpu_custom_call.1} parent=1 // pred_region
      _
    $region29: #{tpu_custom_call.1} parent=1 // pred_fallthru
      _
    // Predicated region
    $region30: #{tpu_custom_call.1} parent=1 // pred_check
      _
    $region31: #{tpu_custom_call.1} parent=1 // pred_check_branch
      %163 = sbr.rel (0) target = $region33
    $region32: #{tpu_custom_call.1} parent=1 // pred_region
      _
    $region33: #{tpu_custom_call.1} parent=1 // pred_fallthru
      _
    %164 = vsyncpa [#allocation3], 1
    %165 = vsyncpa [#allocation5], 1

</llo_original>
